<compile_context>
chip_gen: v6e
topology: v6e:2x2x1
jax: 0.10.0
libtpu: 0.0.40
codegen_flags: <defaults>
</compile_context>

<pallas_src>
import functools

import jax
import jax.numpy as jnp
from jax.experimental import pallas as pl
from jax.experimental.pallas import tpu as pltpu


def _round_up(x, m):
    return ((x + m - 1) // m) * m


# ----------------------------------------------------------------------------
# Kernel: fused twin-critic forward.
#   layer 1: one wide dot (both critics share the state input)
#   layers 2/3: two half-width dots each (per-critic slabs, no zero blocks)
# ----------------------------------------------------------------------------
def _double_critic_kernel(s_ref, w1_ref, w2_ref, w3_ref, b_ref, out_ref,
                          *, H1P, H2P, OP):
    x = s_ref[...].astype(jnp.bfloat16)                       # [TB, DP] bf16 for MXU

    b1 = b_ref[0:1, 0:2 * H1P]                                # fused fc1|fc4 bias
    b2 = b_ref[1:2, 0:H2P]                                    # fc2 bias
    b5 = b_ref[2:3, 0:H2P]                                    # fc5 bias
    b3 = b_ref[3:4, 0:OP]                                     # fc3|fc6 bias (lane-packed)

    # ---- Layer 1 (fused): h = relu(x @ [w1|w4] + [b1|b4]) -------------------
    h = jnp.dot(x, w1_ref[...], preferred_element_type=jnp.float32) + b1
    h = jnp.maximum(h, 0.0).astype(jnp.bfloat16)              # [TB, 2*H1P]
    h1 = h[:, 0:H1P]                                          # critic-1 path
    h2 = h[:, H1P:2 * H1P]                                    # critic-2 path

    # ---- Layer 2: two half-width dots (w2 on top rows, w5 below) ------------
    g1 = jnp.dot(h1, w2_ref[0:H1P, :], preferred_element_type=jnp.float32) + b2
    g2 = jnp.dot(h2, w2_ref[H1P:2 * H1P, :], preferred_element_type=jnp.float32) + b5
    g1 = jnp.maximum(g1, 0.0).astype(jnp.bfloat16)            # [TB, H2P]
    g2 = jnp.maximum(g2, 0.0).astype(jnp.bfloat16)

    # ---- Layer 3: q1 lands in cols [0:nA], q2 in cols [nA:2nA] of one tile ---
    q = (jnp.dot(g1, w3_ref[0:H2P, :], preferred_element_type=jnp.float32)
         + jnp.dot(g2, w3_ref[H2P:2 * H2P, :], preferred_element_type=jnp.float32)
         + b3)
    out_ref[...] = q.astype(out_ref.dtype)                    # lane-dense [TB, OP]


# ----------------------------------------------------------------------------
# Parameter init (matches nn.Linear's U(-1/sqrt(fan_in), 1/sqrt(fan_in))).
# ----------------------------------------------------------------------------
def init_params(key, dimS, nA, hidden1, hidden2):
    def linear(k, fan_in, fan_out):
        kw, kb = jax.random.split(k)
        bound = 1.0 / jnp.sqrt(fan_in)
        w = jax.random.uniform(kw, (fan_in, fan_out), jnp.float32, -bound, bound)
        b = jax.random.uniform(kb, (1, fan_out), jnp.float32, -bound, bound)
        return w, b

    keys = jax.random.split(key, 6)
    w1, b1 = linear(keys[0], dimS, hidden1)
    w2, b2 = linear(keys[1], hidden1, hidden2)
    w3, b3 = linear(keys[2], hidden2, nA)
    w4, b4 = linear(keys[3], dimS, hidden1)
    w5, b5 = linear(keys[4], hidden1, hidden2)
    w6, b6 = linear(keys[5], hidden2, nA)
    return dict(w1=w1, b1=b1, w2=w2, b2=b2, w3=w3, b3=b3,
                w4=w4, b4=b4, w5=w5, b5=b5, w6=w6, b6=b6)


# ----------------------------------------------------------------------------
# One-time packing into lane-aligned bf16 weight slabs + a tiny f32 bias blob.
# ----------------------------------------------------------------------------
def pack_params(p, dimS, nA, hidden1, hidden2):
    DP = _round_up(dimS, 8)            # layer-1 contraction dim (sublane pad)
    H1P = _round_up(hidden1, 128)      # per-critic hidden-1 width (lane aligned)
    H2P = _round_up(hidden2, 128)      # per-critic hidden-2 width
    OP = _round_up(2 * nA, 128)        # combined output width (lane dense)
    LMAX = max(2 * H1P, H2P, OP)       # bias blob only (negligible bytes)

    def place(rows, cols, blocks):
        a = jnp.zeros((rows, cols), jnp.float32)
        for (r, c, blk) in blocks:
            a = a.at[r:r + blk.shape[0], c:c + blk.shape[1]].set(blk)
        return a.astype(jnp.bfloat16)

    # Layer 1: concatenate along outputs (per-critic halves lane-aligned at H1P).
    w1cat = place(DP, 2 * H1P, [(0, 0, p["w1"]), (0, H1P, p["w4"])])
    # Layer 2: stack per-critic slabs along rows (NO zero blocks).
    w2stk = place(2 * H1P, H2P, [(0, 0, p["w2"]), (H1P, 0, p["w5"])])
    # Layer 3: stack per-critic slabs along rows; q1 -> cols [0:nA], q2 -> [nA:2nA].
    w3stk = place(2 * H2P, OP, [(0, 0, p["w3"]), (H2P, nA, p["w6"])])

    bblob = jnp.zeros((8, LMAX), jnp.float32)
    bblob = bblob.at[0, 0:hidden1].set(p["b1"][0])
    bblob = bblob.at[0, H1P:H1P + hidden1].set(p["b4"][0])
    bblob = bblob.at[1, 0:hidden2].set(p["b2"][0])
    bblob = bblob.at[2, 0:hidden2].set(p["b5"][0])
    bblob = bblob.at[3, 0:nA].set(p["b3"][0])
    bblob = bblob.at[3, nA:2 * nA].set(p["b6"][0])

    dims = dict(DP=DP, H1P=H1P, H2P=H2P, OP=OP, dimS=dimS, nA=nA)
    return dict(w1=w1cat, w2=w2stk, w3=w3stk, b=bblob, dims=dims)


# ----------------------------------------------------------------------------
# Wrapper
# ----------------------------------------------------------------------------
def double_critic_forward(state, packed, *, batch_block=None,
                          out_dtype=jnp.float32):
    """state: [B, dimS] f32.  Returns (q1, q2), each [B, nA] in out_dtype."""
    w1cat, w2stk, w3stk, bblob = packed["w1"], packed["w2"], packed["w3"], packed["b"]
    d = packed["dims"]
    DP, H1P, H2P, OP, nA = d["DP"], d["H1P"], d["H2P"], d["OP"], d["nA"]

    B, dimS = state.shape
    if DP != dimS:                      # zero-pad contraction dim once
        state = jnp.pad(state, ((0, 0), (0, DP - dimS)))

    kernel = functools.partial(_double_critic_kernel, H1P=H1P, H2P=H2P, OP=OP)
    vmem = pl.BlockSpec(memory_space=pltpu.MemorySpace.VMEM)

    # Auto-pick a fat batch tile at large B (fewer, larger grid steps; still
    # >=2 steps so both v7x TensorCores get work via "parallel").
    if batch_block is None and B >= 512:
        batch_block = 256

    if batch_block is None or batch_block >= B:
        # Grid-less: everything resident in VMEM, one invocation (toy / small B).
        out = pl.pallas_call(
            kernel,
            out_shape=jax.ShapeDtypeStruct((B, OP), out_dtype),
            in_specs=[vmem, vmem, vmem, vmem, vmem],
            out_specs=vmem,
        )(state, w1cat, w2stk, w3stk, bblob)
    else:
        # Large-batch path: pipelined batch tiles, single-buffered weights.
        Bp = _round_up(B, batch_block)
        if Bp != B:                     # ragged replay-buffer batches: zero-pad
            state = jnp.pad(state, ((0, Bp - B), (0, 0)))

        out_itemsize = jnp.dtype(out_dtype).itemsize
        w_bytes = 2 * (w1cat.size + w2stk.size + w3stk.size) + 4 * bblob.size
        act_bytes = batch_block * (2 * H1P + 2 * H2P) * 6          # f32 + bf16 copies
        io_bytes = 2 * batch_block * (DP * 4 + OP * out_itemsize)  # double-buffered tiles
        vmem_limit = min(int(1.5 * (w_bytes + act_bytes + io_bytes)) + (4 << 20),
                         64 << 20)      # v7x physical ceiling; shrink batch_block if hit

        out = pl.pallas_call(
            kernel,
            out_shape=jax.ShapeDtypeStruct((Bp, OP), out_dtype),
            grid=(pl.cdiv(Bp, batch_block),),
            in_specs=[
                pl.BlockSpec((batch_block, DP), lambda i: (i, 0)),
                vmem, vmem, vmem, vmem,   # invariant weights: not pipelined
            ],
            out_specs=pl.BlockSpec((batch_block, OP), lambda i: (i, 0)),
            compiler_params=pltpu.CompilerParams(
                dimension_semantics=("parallel",),
                vmem_limit_bytes=vmem_limit),
        )(state, w1cat, w2stk, w3stk, bblob)
        out = out[:B]

    q1 = out[:, :nA]
    q2 = out[:, nA:2 * nA]
    return q1, q2


# ----------------------------------------------------------------------------
# References
# ----------------------------------------------------------------------------
def reference_forward(state, p):
    """Pure-f32 reference matching the PyTorch forward."""
    x1 = jnp.maximum(state @ p["w1"] + p["b1"], 0.0)
    x1 = jnp.maximum(x1 @ p["w2"] + p["b2"], 0.0)
    x1 = x1 @ p["w3"] + p["b3"]
    x2 = jnp.maximum(state @ p["w4"] + p["b4"], 0.0)
    x2 = jnp.maximum(x2 @ p["w5"] + p["b5"], 0.0)
    x2 = x2 @ p["w6"] + p["b6"]
    return x1, x2


def reference_forward_bf16(state, p):
    """Reference mirroring the kernel's bf16-operand / f32-accumulate casts."""
    f = lambda a: a.astype(jnp.bfloat16).astype(jnp.float32)

    def critic(wa, ba, wb, bb, wc, bc):
        h = jnp.maximum(f(state) @ f(wa) + ba, 0.0)
        g = jnp.maximum(f(h) @ f(wb) + bb, 0.0)
        return f(g) @ f(wc) + bc

    q1 = critic(p["w1"], p["b1"], p["w2"], p["b2"], p["w3"], p["b3"])
    q2 = critic(p["w4"], p["b4"], p["w5"], p["b5"], p["w6"], p["b6"])
    return q1, q2


if __name__ == "__main__":
    B, dimS, nA, hidden1, hidden2 = 8, 24, 4, 32, 32

    key = jax.random.PRNGKey(0)
    k_state, k_params, k_big = jax.random.split(key, 3)
    state = jax.random.normal(k_state, (B, dimS), dtype=jnp.float32)
    params = init_params(k_params, dimS, nA, hidden1, hidden2)
    packed = pack_params(params, dimS, nA, hidden1, hidden2)

    # --- grid-less small-batch path -----------------------------------------
    q1, q2 = double_critic_forward(state, packed)
    q1, q2 = jax.block_until_ready((q1, q2))
    rb1, rb2 = reference_forward_bf16(state, params)
    assert jnp.allclose(q1, rb1, atol=1e-4, rtol=1e-4), "q1 mismatch (bf16 ref)"
    assert jnp.allclose(q2, rb2, atol=1e-4, rtol=1e-4), "q2 mismatch (bf16 ref)"
    rf1, rf2 = reference_forward(state, params)
    assert jnp.allclose(q1, rf1, atol=5e-2, rtol=5e-2), "q1 drifted from f32 ref"
    assert jnp.allclose(q2, rf2, atol=5e-2, rtol=5e-2), "q2 drifted from f32 ref"

    # --- batched-grid path (ragged batch exercises the padding path) --------
    Bbig = 50
    state_big = jax.random.normal(k_big, (Bbig, dimS), dtype=jnp.float32)
    g1, g2 = double_critic_forward(state_big, packed, batch_block=16)
    g1, g2 = jax.block_until_ready((g1, g2))
    sb1, sb2 = reference_forward_bf16(state_big, params)
    assert g1.shape == (Bbig, nA) and g2.shape == (Bbig, nA)
    assert jnp.allclose(g1, sb1, atol=1e-4, rtol=1e-4), "q1 (grid) mismatch"
    assert jnp.allclose(g2, sb2, atol=1e-4, rtol=1e-4), "q2 (grid) mismatch"

    print("KERNEL_OK")
</pallas_src>

<mosaic_0001>
module attributes {stable_mosaic.version = 11 : i64} {
  func.func @_double_critic_kernel(%arg0: memref<8x24xf32, #tpu.memory_space<vmem>>, %arg1: memref<24x256xbf16, #tpu.memory_space<vmem>>, %arg2: memref<256x128xbf16, #tpu.memory_space<vmem>>, %arg3: memref<256x128xbf16, #tpu.memory_space<vmem>>, %arg4: memref<8x256xf32, #tpu.memory_space<vmem>>, %arg5: memref<8x128xf32, #tpu.memory_space<vmem>>) attributes {dimension_semantics = [], scalar_prefetch = 0 : i64, scratch_operands = 0 : i64, tpu.core_type = #tpu.core_type<tc>} {
    %c0 = arith.constant 0 : index
    %c0_0 = arith.constant 0 : index
    %0 = vector.load %arg0[%c0, %c0_0] : memref<8x24xf32, #tpu.memory_space<vmem>>, vector<8x24xf32>
    %1 = arith.truncf %0 : vector<8x24xf32> to vector<8x24xbf16>
    %c0_1 = arith.constant 0 : index
    %c0_2 = arith.constant 0 : index
    %2 = vector.load %arg4[%c0_1, %c0_2] : memref<8x256xf32, #tpu.memory_space<vmem>>, vector<1x256xf32>
    %c1 = arith.constant 1 : index
    %c0_3 = arith.constant 0 : index
    %3 = vector.load %arg4[%c1, %c0_3] : memref<8x256xf32, #tpu.memory_space<vmem>>, vector<1x128xf32>
    %c2 = arith.constant 2 : index
    %c0_4 = arith.constant 0 : index
    %4 = vector.load %arg4[%c2, %c0_4] : memref<8x256xf32, #tpu.memory_space<vmem>>, vector<1x128xf32>
    %c3 = arith.constant 3 : index
    %c0_5 = arith.constant 0 : index
    %5 = vector.load %arg4[%c3, %c0_5] : memref<8x256xf32, #tpu.memory_space<vmem>>, vector<1x128xf32>
    %c0_6 = arith.constant 0 : index
    %c0_7 = arith.constant 0 : index
    %6 = vector.load %arg1[%c0_6, %c0_7] : memref<24x256xbf16, #tpu.memory_space<vmem>>, vector<24x256xbf16>
    %cst = arith.constant dense<0.000000e+00> : vector<8x256xf32>
    %7 = tpu.matmul %1, %6, %cst {dimension_numbers = #tpu.dot_dimension_numbers<[1], [0], [0], [1], [0, 0, 1, 1], [], []>} : vector<8x24xbf16>, vector<24x256xbf16>, vector<8x256xf32> -> vector<8x256xf32>
    %8 = vector.broadcast %2 : vector<1x256xf32> to vector<8x256xf32>
    %9 = arith.addf %7, %8 : vector<8x256xf32>
    %cst_8 = arith.constant 0.000000e+00 : f32
    %10 = vector.broadcast %cst_8 : f32 to vector<8x256xf32>
    %11 = arith.maximumf %9, %10 : vector<8x256xf32>
    %12 = arith.truncf %11 : vector<8x256xf32> to vector<8x256xbf16>
    %13 = vector.extract_strided_slice %12 {offsets = [0, 0], sizes = [8, 128], strides = [1, 1]} : vector<8x256xbf16> to vector<8x128xbf16>
    %14 = vector.extract_strided_slice %12 {offsets = [0, 128], sizes = [8, 128], strides = [1, 1]} : vector<8x256xbf16> to vector<8x128xbf16>
    %c0_9 = arith.constant 0 : index
    %c0_10 = arith.constant 0 : index
    %15 = vector.load %arg2[%c0_9, %c0_10] : memref<256x128xbf16, #tpu.memory_space<vmem>>, vector<128x128xbf16>
    %cst_11 = arith.constant dense<0.000000e+00> : vector<8x128xf32>
    %16 = tpu.matmul %13, %15, %cst_11 {dimension_numbers = #tpu.dot_dimension_numbers<[1], [0], [0], [1], [0, 0, 1, 1], [], []>} : vector<8x128xbf16>, vector<128x128xbf16>, vector<8x128xf32> -> vector<8x128xf32>
    %17 = vector.broadcast %3 : vector<1x128xf32> to vector<8x128xf32>
    %18 = arith.addf %16, %17 : vector<8x128xf32>
    %c128 = arith.constant 128 : index
    %c0_12 = arith.constant 0 : index
    %19 = vector.load %arg2[%c128, %c0_12] : memref<256x128xbf16, #tpu.memory_space<vmem>>, vector<128x128xbf16>
    %cst_13 = arith.constant dense<0.000000e+00> : vector<8x128xf32>
    %20 = tpu.matmul %14, %19, %cst_13 {dimension_numbers = #tpu.dot_dimension_numbers<[1], [0], [0], [1], [0, 0, 1, 1], [], []>} : vector<8x128xbf16>, vector<128x128xbf16>, vector<8x128xf32> -> vector<8x128xf32>
    %21 = vector.broadcast %4 : vector<1x128xf32> to vector<8x128xf32>
    %22 = arith.addf %20, %21 : vector<8x128xf32>
    %cst_14 = arith.constant 0.000000e+00 : f32
    %23 = vector.broadcast %cst_14 : f32 to vector<8x128xf32>
    %24 = arith.maximumf %18, %23 : vector<8x128xf32>
    %25 = arith.truncf %24 : vector<8x128xf32> to vector<8x128xbf16>
    %cst_15 = arith.constant 0.000000e+00 : f32
    %26 = vector.broadcast %cst_15 : f32 to vector<8x128xf32>
    %27 = arith.maximumf %22, %26 : vector<8x128xf32>
    %28 = arith.truncf %27 : vector<8x128xf32> to vector<8x128xbf16>
    %c0_16 = arith.constant 0 : index
    %c0_17 = arith.constant 0 : index
    %29 = vector.load %arg3[%c0_16, %c0_17] : memref<256x128xbf16, #tpu.memory_space<vmem>>, vector<128x128xbf16>
    %cst_18 = arith.constant dense<0.000000e+00> : vector<8x128xf32>
    %30 = tpu.matmul %25, %29, %cst_18 {dimension_numbers = #tpu.dot_dimension_numbers<[1], [0], [0], [1], [0, 0, 1, 1], [], []>} : vector<8x128xbf16>, vector<128x128xbf16>, vector<8x128xf32> -> vector<8x128xf32>
    %c128_19 = arith.constant 128 : index
    %c0_20 = arith.constant 0 : index
    %31 = vector.load %arg3[%c128_19, %c0_20] : memref<256x128xbf16, #tpu.memory_space<vmem>>, vector<128x128xbf16>
    %cst_21 = arith.constant dense<0.000000e+00> : vector<8x128xf32>
    %32 = tpu.matmul %28, %31, %cst_21 {dimension_numbers = #tpu.dot_dimension_numbers<[1], [0], [0], [1], [0, 0, 1, 1], [], []>} : vector<8x128xbf16>, vector<128x128xbf16>, vector<8x128xf32> -> vector<8x128xf32>
    %33 = arith.addf %30, %32 : vector<8x128xf32>
    %34 = vector.broadcast %5 : vector<1x128xf32> to vector<8x128xf32>
    %35 = arith.addf %33, %34 : vector<8x128xf32>
    %c0_22 = arith.constant 0 : index
    %c0_23 = arith.constant 0 : index
    %36 = vector.load %arg5[%c0_22, %c0_23] : memref<8x128xf32, #tpu.memory_space<vmem>>, vector<8x128xf32>
    tpu.vector_store %arg5[%c0_22, %c0_23], %35 {strides = array<i32>} : memref<8x128xf32, #tpu.memory_space<vmem>>, vector<8x128xf32>,
    return
  }
}

</mosaic_0001>

<llo_original>
// kernel: tpu_custom_call.1
$region0: #{tpu_custom_call.1}
  #allocation0 [shape = 'u32[]', space=smem, size = 0x4, offset = 0x4, fixed_abs, tag = 'smem constant byte address 0x4 - core index']
  #allocation1 [shape = 'u32[144,128]{1,0:T(1,128)}', space=vmem, size = 0x12000, scoped, tag = 'internal scratch']
  %s0 = inlined_call_operand.hbm [shape: f32[8,24], index: 0, kind: input, shape index: {}]
  %s1 = inlined_call_operand.hbm [shape: bf16[24,256], index: 1, kind: input, shape index: {}]
  %s2 = inlined_call_operand.hbm [shape: bf16[256,128], index: 2, kind: input, shape index: {}]
  %s3 = inlined_call_operand.hbm [shape: bf16[256,128], index: 3, kind: input, shape index: {}]
  %s4 = inlined_call_operand.hbm [shape: f32[8,256], index: 4, kind: input, shape index: {}]
  %s5 = inlined_call_operand.hbm [shape: f32[8,128], index: 5, kind: output, shape index: {}]
  %s6 = sld [smem:[#allocation0]]
  $region50: #{tpu_custom_call.1} parent=0
    _
  %s8 = ssub.s32 1, %s6
  %s9 = scalar_select 0, %s8, %s6
  $region1: #{tpu_custom_call.1} parent=0
    #allocation2 [shape = 'u8[4096]{0}', space=vmem, size = 0x1000, scoped, tag = 'input window, operand 0, single buffered']
    #allocation3 [shape = 's32[1]{0}', space=sflag, size = 0x4, scoped, tag = 'scoped memory for tpu_custom_call.1']
    #allocation4 [shape = 's32[1]{0}', space=sflag, size = 0x4, scoped, tag = 'scoped memory for tpu_custom_call.1']
    #allocation5 [shape = 'u8[12288]{0}', space=vmem, size = 0x3000, scoped, tag = 'input window, operand 1, single buffered']
    #allocation6 [shape = 's32[1]{0}', space=sflag, size = 0x4, scoped, tag = 'scoped memory for tpu_custom_call.1']
    #allocation7 [shape = 'u8[65536]{0}', space=vmem, size = 0x10000, scoped, tag = 'input window, operand 2, single buffered']
    #allocation8 [shape = 'u8[65536]{0}', space=vmem, size = 0x10000, scoped, tag = 'input window, operand 3, single buffered']
    #allocation9 [shape = 's32[1]{0}', space=sflag, size = 0x4, scoped, tag = 'scoped memory for tpu_custom_call.1']
    #allocation10 [shape = 'u8[8192]{0}', space=vmem, size = 0x2000, scoped, tag = 'input window, operand 4, single buffered']
    #allocation11 [shape = 'u8[4096]{0}', space=vmem, size = 0x1000, scoped, tag = 'output window, operand 0, single buffered']
    %10 = vsyncpa [#allocation3], 0
    %11 = vsyncpa [#allocation6], 0
    %12 = vsyncpa [#allocation9], 0
    %13 = vsyncpa [#allocation4], 0
    // Predicated region
    $region2: #{tpu_custom_call.1} parent=1 // pred_check
      _
    $region3: #{tpu_custom_call.1} parent=1 // pred_check_branch
      %15 = sbr.rel (0) target = $region5
    $region4: #{tpu_custom_call.1} parent=1 // pred_region
      %s17 = ssub.s32 128, 128
      %18 = vsyncadd [#allocation3], %s17
      %s20 = sshll.u32 [#allocation2], 4
      %s21 = int_to_ptr.vmem [resolvable:$true] %s20
      %23 = dma.hbm_to_vmem [thread:$0]  %s0, 128, %s21, [#allocation3]
    $region5: #{tpu_custom_call.1} parent=1 // pred_fallthru
      _
    // Predicated region
    $region6: #{tpu_custom_call.1} parent=1 // pred_check
      _
    $region7: #{tpu_custom_call.1} parent=1 // pred_check_branch
      %25 = sbr.rel (0) target = $region9
    $region8: #{tpu_custom_call.1} parent=1 // pred_region
      %s27 = ssub.s32 384, 384
      %28 = vsyncadd [#allocation6], %s27
      %s29 = sshll.u32 [#allocation5], 4
      %s30 = int_to_ptr.vmem [resolvable:$true] %s29
      %35 = dma.hbm_to_vmem [thread:$0]  %s1, 384, %s30, [#allocation6], 128, 128, 8
    $region9: #{tpu_custom_call.1} parent=1 // pred_fallthru
      _
    // Predicated region
    $region10: #{tpu_custom_call.1} parent=1 // pred_check
      _
    $region11: #{tpu_custom_call.1} parent=1 // pred_check_branch
      %37 = sbr.rel (0) target = $region13
    $region12: #{tpu_custom_call.1} parent=1 // pred_region
      %s39 = ssub.s32 2048, 2048
      %40 = vsyncadd [#allocation6], %s39
      %s41 = sshll.u32 [#allocation7], 4
      %s42 = int_to_ptr.vmem [resolvable:$true] %s41
      %47 = dma.hbm_to_vmem [thread:$0]  %s2, 2048, %s42, [#allocation6], 64, 64, 4
    $region13: #{tpu_custom_call.1} parent=1 // pred_fallthru
      _
    // Predicated region
    $region14: #{tpu_custom_call.1} parent=1 // pred_check
      _
    $region15: #{tpu_custom_call.1} parent=1 // pred_check_branch
      %49 = sbr.rel (0) target = $region17
    $region16: #{tpu_custom_call.1} parent=1 // pred_region
      %s51 = ssub.s32 2048, 2048
      %52 = vsyncadd [#allocation9], %s51
      %s53 = sshll.u32 [#allocation8], 4
      %s54 = int_to_ptr.vmem [resolvable:$true] %s53
      %59 = dma.hbm_to_vmem [thread:$0]  %s3, 2048, %s54, [#allocation9], 64, 64, 4
    $region17: #{tpu_custom_call.1} parent=1 // pred_fallthru
      _
    // Predicated region
    $region18: #{tpu_custom_call.1} parent=1 // pred_check
      _
    $region19: #{tpu_custom_call.1} parent=1 // pred_check_branch
      %61 = sbr.rel (0) target = $region21
    $region20: #{tpu_custom_call.1} parent=1 // pred_region
      %s63 = ssub.s32 256, 256
      %64 = vsyncadd [#allocation9], %s63
      %s66 = sshll.u32 [#allocation10], 4
      %s67 = int_to_ptr.vmem [resolvable:$true] %s66
      %69 = dma.hbm_to_vmem [thread:$0]  %s4, 256, %s67, [#allocation9]
    $region21: #{tpu_custom_call.1} parent=1 // pred_fallthru
      _
    // Predicated region
    $region22: #{tpu_custom_call.1} parent=1 // pred_check
      _
    $region23: #{tpu_custom_call.1} parent=1 // pred_check_branch
      %71 = sbr.rel (0) target = $region25
    $region24: #{tpu_custom_call.1} parent=1 // pred_region
      %72 = dma.done [#allocation3], 128
    $region25: #{tpu_custom_call.1} parent=1 // pred_fallthru
      _
    // Predicated region
    $region26: #{tpu_custom_call.1} parent=1 // pred_check
      _
    $region27: #{tpu_custom_call.1} parent=1 // pred_check_branch
      %74 = sbr.rel (0) target = $region29
    $region28: #{tpu_custom_call.1} parent=1 // pred_region
      %75 = dma.done [#allocation6], 384
    $region29: #{tpu_custom_call.1} parent=1 // pred_fallthru
      _
    // Predicated region
    $region30: #{tpu_custom_call.1} parent=1 // pred_check
      _
    $region31: #{tpu_custom_call.1} parent=1 // pred_check_branch
      %77 = sbr.rel (0) target = $region33
    $region32: #{tpu_custom_call.1} parent=1 // pred_region
      %78 = dma.done [#allocation6], 2048
    $region33: #{tpu_custom_call.1} parent=1 // pred_fallthru
      _
    // Predicated region
    $region34: #{tpu_custom_call.1} parent=1 // pred_check
      _
    $region35: #{tpu_custom_call.1} parent=1 // pred_check_branch
      %80 = sbr.rel (0) target = $region37
    $region36: #{tpu_custom_call.1} parent=1 // pred_region
      %81 = dma.done [#allocation9], 2048
    $region37: #{tpu_custom_call.1} parent=1 // pred_fallthru
      _
    // Predicated region
    $region38: #{tpu_custom_call.1} parent=1 // pred_check
      _
    $region39: #{tpu_custom_call.1} parent=1 // pred_check_branch
      %83 = sbr.rel (0) target = $region41
    $region40: #{tpu_custom_call.1} parent=1 // pred_region
      %84 = dma.done [#allocation9], 256
    $region41: #{tpu_custom_call.1} parent=1 // pred_fallthru
      _
    %v86 = vld [vmem:[#allocation2] sm:$0xff]
    %v87 = vpack.c.bf16 %v86, %v86
    %v88 = vld [vmem:[#allocation10] ss:$8 sm:$0x3]
    %v89 = vld [vmem:[#allocation10 + $0x1] ss:$0 sm:$0xff]
    %v90 = vld [vmem:[#allocation10 + $0x2] ss:$0 sm:$0xff]
    %v91 = vld [vmem:[#allocation10 + $0x3] ss:$0 sm:$0xff]
    %v92 = vld [vmem:[#allocation5] sm:$0xff]
    %v93 = vld [vmem:[#allocation5 + $0x8] sm:$0xff]
    %v94 = vld [vmem:[#allocation5 + $0x10] sm:$0xff]
    %v96 = vlaneseq
    %v97 = vshrl.u32 %v96, 7
    %v98 = vsub.s32 0, %v97
    %v99 = vrot.slane %v88, %v98
    %v100 = vlaneseq
    %v101 = vshrl.u32 %v100, 7
    %v102 = vsub.s32 1, %v101
    %v103 = vrot.slane %v88, %v102
    %v109 = vunpack.c.l.b16 %v92
    %v110 = vunpack.c.h.b16 %v92
    %v111 = vunpack.c.l.b16 %v93
    %v112 = vunpack.c.h.b16 %v93
    %v113 = vunpack.c.l.b16 %v94
    %v114 = vunpack.c.h.b16 %v94
    %v115 = vpack.c.b16 %v111, %v109
    %v116 = vpack.c.b16 %v112, %v110
    %v117 = vpack.c.b16 %v113, %v113
    %v118 = vpack.c.b16 %v114, %v114
    %vm121 = vcmask 195584
    %v123 = vsel %vm121, %v87, 0
    %vm125 = vcmask 1043456
    %v127 = vsel %vm125, %v117, 0
    %v130 = vsel %vm125, %v118, 0
    %132 = vmatprep.subr.bf16.mxu0 0
    %133 = vmatpush1.bf16.msra.mxu0 0
    %134 = vmatprep.subr.bf16.mxu0 0
    %135 = vmatpush1.bf16.msra.mxu0 0
    %136 = vmatprep.subr.bf16.mxu0 0
    %137 = vmatpush1.bf16.msra.mxu0 0
    %138 = vmatprep.subr.bf16.mxu0 0
    %139 = vmatpush1.bf16.msra.mxu0 0
    %140 = vmatprep.subr.bf16.mxu0 0
    %141 = vmatpush1.bf16.msra.mxu0 0
    %142 = vmatprep.subr.bf16.mxu0 0
    %143 = vmatpush1.bf16.msra.mxu0 0
    %144 = vmatprep.subr.bf16.mxu0 %v130
    %145 = vmatpush1.bf16.msra.mxu0 %v127
    %146 = vmatprep.subr.bf16.mxu0 %v116
    %147 = vmatpush1.bf16.msra.mxu0 %v115
    %148 = vmatprep.subr.bf16.mxu0 0
    %149 = vmatpush2.bf16.msra.mxu0 0
    %150 = vmatprep.subr.bf16.mxu0 0
    %151 = vmatpush2.bf16.msra.mxu0 0
    %152 = vmatprep.subr.bf16.mxu0 0
    %153 = vmatpush2.bf16.msra.mxu0 0
    %154 = vmatprep.subr.bf16.mxu0 0
    %155 = vmatpush2.bf16.msra.mxu0 0
    %156 = vmatprep.subr.bf16.mxu0 0
    %157 = vmatpush2.bf16.msra.mxu0 0
    %158 = vmatprep.subr.bf16.mxu0 0
    %159 = vmatpush2.bf16.msra.mxu0 0
    %160 = vmatprep.subr.bf16.mxu0 0
    %161 = vmatpush2.bf16.msra.mxu0 0
    %162 = vmatprep.subr.bf16.mxu0 0
    %163 = vmatpush2.bf16.msra.mxu0 0
    %164 = vmatprep.mubr.bf16.mxu0 0
    %165 = vmatmul.mubr.bf16.gmra.mxu0 %v123
    %v166 = vpop.f32.mrf.mxu0
    %v167 = vadd.f32 %v99, %v166
    %v168 = vpop.f32.mrf.mxu0
    %v169 = vadd.f32 %v103, %v168
    %v170 = vpop.f32.mrf.mxu0
    %v171 = vpop.f32.mrf.mxu0
    %172 = vdwg.mxu0
    %v173 = vmax.f32 %v167, 0.0
    %v174 = vmax.f32 %v169, 0.0
    %v175 = vpack.c.bf16 %v173, %v173
    %v176 = vpack.c.bf16 %v174, %v174
    %v177 = vld [vmem:[#allocation7] sm:$0xf]
    %v178 = vld [vmem:[#allocation7 + $0x4] sm:$0xf]
    %v179 = vld [vmem:[#allocation7 + $0x8] sm:$0xf]
    %v180 = vld [vmem:[#allocation7 + $0xc] sm:$0xf]
    %v181 = vld [vmem:[#allocation7 + $0x10] sm:$0xf]
    %v182 = vld [vmem:[#allocation7 + $0x14] sm:$0xf]
    %v183 = vld [vmem:[#allocation7 + $0x18] sm:$0xf]
    %v184 = vld [vmem:[#allocation7 + $0x1c] sm:$0xf]
    %v185 = vld [vmem:[#allocation7 + $0x20] sm:$0xf]
    %v186 = vld [vmem:[#allocation7 + $0x24] sm:$0xf]
    %v187 = vld [vmem:[#allocation7 + $0x28] sm:$0xf]
    %v188 = vld [vmem:[#allocation7 + $0x2c] sm:$0xf]
    %v189 = vld [vmem:[#allocation7 + $0x30] sm:$0xf]
    %v190 = vld [vmem:[#allocation7 + $0x34] sm:$0xf]
    %v191 = vld [vmem:[#allocation7 + $0x38] sm:$0xf]
    %v192 = vld [vmem:[#allocation7 + $0x3c] sm:$0xf]
    %v209 = vunpack.c.l.b16 %v177
    %v210 = vunpack.c.l.b16 %v178
    %v211 = vunpack.c.l.b16 %v179
    %v212 = vunpack.c.l.b16 %v180
    %v213 = vunpack.c.l.b16 %v181
    %v214 = vunpack.c.l.b16 %v182
    %v215 = vunpack.c.l.b16 %v183
    %v216 = vunpack.c.l.b16 %v184
    %v217 = vunpack.c.l.b16 %v185
    %v218 = vunpack.c.l.b16 %v186
    %v219 = vunpack.c.l.b16 %v187
    %v220 = vunpack.c.l.b16 %v188
    %v221 = vunpack.c.l.b16 %v189
    %v222 = vunpack.c.l.b16 %v190
    %v223 = vunpack.c.l.b16 %v191
    %v224 = vunpack.c.l.b16 %v192
    %v225 = vpack.c.b16 %v210, %v209
    %v226 = vpack.c.b16 %v212, %v211
    %v227 = vpack.c.b16 %v214, %v213
    %v228 = vpack.c.b16 %v216, %v215
    %v229 = vpack.c.b16 %v218, %v217
    %v230 = vpack.c.b16 %v220, %v219
    %v231 = vpack.c.b16 %v222, %v221
    %v232 = vpack.c.b16 %v224, %v223
    %241 = vmatprep.subr.bf16.mxu0 0
    %242 = vmatpush1.bf16.msra.mxu0 %v232
    %243 = vmatprep.subr.bf16.mxu0 0
    %244 = vmatpush1.bf16.msra.mxu0 %v231
    %245 = vmatprep.subr.bf16.mxu0 0
    %246 = vmatpush1.bf16.msra.mxu0 %v230
    %247 = vmatprep.subr.bf16.mxu0 0
    %248 = vmatpush1.bf16.msra.mxu0 %v229
    %249 = vmatprep.subr.bf16.mxu0 0
    %250 = vmatpush1.bf16.msra.mxu0 %v228
    %251 = vmatprep.subr.bf16.mxu0 0
    %252 = vmatpush1.bf16.msra.mxu0 %v227
    %253 = vmatprep.subr.bf16.mxu0 0
    %254 = vmatpush1.bf16.msra.mxu0 %v226
    %255 = vmatprep.subr.bf16.mxu0 0
    %256 = vmatpush1.bf16.msra.mxu0 %v225
    %257 = vmatprep.subr.bf16.mxu0 0
    %258 = vmatpush2.bf16.msra.mxu0 0
    %259 = vmatprep.subr.bf16.mxu0 0
    %260 = vmatpush2.bf16.msra.mxu0 0
    %261 = vmatprep.subr.bf16.mxu0 0
    %262 = vmatpush2.bf16.msra.mxu0 0
    %263 = vmatprep.subr.bf16.mxu0 0
    %264 = vmatpush2.bf16.msra.mxu0 0
    %265 = vmatprep.subr.bf16.mxu0 0
    %266 = vmatpush2.bf16.msra.mxu0 0
    %267 = vmatprep.subr.bf16.mxu0 0
    %268 = vmatpush2.bf16.msra.mxu0 0
    %269 = vmatprep.subr.bf16.mxu0 0
    %270 = vmatpush2.bf16.msra.mxu0 0
    %271 = vmatprep.subr.bf16.mxu0 0
    %272 = vmatpush2.bf16.msra.mxu0 0
    %273 = vmatprep.mubr.bf16.mxu0 0
    %274 = vmatmul.mubr.bf16.gmra.mxu0 %v175
    %v275 = vpop.f32.mrf.mxu0
    %v276 = vadd.f32 %v89, %v275
    %v277 = vpop.f32.mrf.mxu0
    %v278 = vpop.f32.mrf.mxu0
    %v279 = vpop.f32.mrf.mxu0
    %280 = vdwg.mxu0
    %v281 = vld [vmem:[#allocation7 + $0x40] sm:$0xf]
    %v282 = vld [vmem:[#allocation7 + $0x44] sm:$0xf]
    %v283 = vld [vmem:[#allocation7 + $0x48] sm:$0xf]
    %v284 = vld [vmem:[#allocation7 + $0x4c] sm:$0xf]
    %v285 = vld [vmem:[#allocation7 + $0x50] sm:$0xf]
    %v286 = vld [vmem:[#allocation7 + $0x54] sm:$0xf]
    %v287 = vld [vmem:[#allocation7 + $0x58] sm:$0xf]
    %v288 = vld [vmem:[#allocation7 + $0x5c] sm:$0xf]
    %v289 = vld [vmem:[#allocation7 + $0x60] sm:$0xf]
    %v290 = vld [vmem:[#allocation7 + $0x64] sm:$0xf]
    %v291 = vld [vmem:[#allocation7 + $0x68] sm:$0xf]
    %v292 = vld [vmem:[#allocation7 + $0x6c] sm:$0xf]
    %v293 = vld [vmem:[#allocation7 + $0x70] sm:$0xf]
    %v294 = vld [vmem:[#allocation7 + $0x74] sm:$0xf]
    %v295 = vld [vmem:[#allocation7 + $0x78] sm:$0xf]
    %v296 = vld [vmem:[#allocation7 + $0x7c] sm:$0xf]
    %v313 = vunpack.c.l.b16 %v281
    %v314 = vunpack.c.l.b16 %v282
    %v315 = vunpack.c.l.b16 %v283
    %v316 = vunpack.c.l.b16 %v284
    %v317 = vunpack.c.l.b16 %v285
    %v318 = vunpack.c.l.b16 %v286
    %v319 = vunpack.c.l.b16 %v287
    %v320 = vunpack.c.l.b16 %v288
    %v321 = vunpack.c.l.b16 %v289
    %v322 = vunpack.c.l.b16 %v290
    %v323 = vunpack.c.l.b16 %v291
    %v324 = vunpack.c.l.b16 %v292
    %v325 = vunpack.c.l.b16 %v293
    %v326 = vunpack.c.l.b16 %v294
    %v327 = vunpack.c.l.b16 %v295
    %v328 = vunpack.c.l.b16 %v296
    %v329 = vpack.c.b16 %v314, %v313
    %v330 = vpack.c.b16 %v316, %v315
    %v331 = vpack.c.b16 %v318, %v317
    %v332 = vpack.c.b16 %v320, %v319
    %v333 = vpack.c.b16 %v322, %v321
    %v334 = vpack.c.b16 %v324, %v323
    %v335 = vpack.c.b16 %v326, %v325
    %v336 = vpack.c.b16 %v328, %v327
    %345 = vmatprep.subr.bf16.mxu0 0
    %346 = vmatpush1.bf16.msra.mxu0 %v336
    %347 = vmatprep.subr.bf16.mxu0 0
    %348 = vmatpush1.bf16.msra.mxu0 %v335
    %349 = vmatprep.subr.bf16.mxu0 0
    %350 = vmatpush1.bf16.msra.mxu0 %v334
    %351 = vmatprep.subr.bf16.mxu0 0
    %352 = vmatpush1.bf16.msra.mxu0 %v333
    %353 = vmatprep.subr.bf16.mxu0 0
    %354 = vmatpush1.bf16.msra.mxu0 %v332
    %355 = vmatprep.subr.bf16.mxu0 0
    %356 = vmatpush1.bf16.msra.mxu0 %v331
    %357 = vmatprep.subr.bf16.mxu0 0
    %358 = vmatpush1.bf16.msra.mxu0 %v330
    %359 = vmatprep.subr.bf16.mxu0 0
    %360 = vmatpush1.bf16.msra.mxu0 %v329
    %361 = vmatprep.subr.bf16.mxu0 0
    %362 = vmatpush2.bf16.msra.mxu0 0
    %363 = vmatprep.subr.bf16.mxu0 0
    %364 = vmatpush2.bf16.msra.mxu0 0
    %365 = vmatprep.subr.bf16.mxu0 0
    %366 = vmatpush2.bf16.msra.mxu0 0
    %367 = vmatprep.subr.bf16.mxu0 0
    %368 = vmatpush2.bf16.msra.mxu0 0
    %369 = vmatprep.subr.bf16.mxu0 0
    %370 = vmatpush2.bf16.msra.mxu0 0
    %371 = vmatprep.subr.bf16.mxu0 0
    %372 = vmatpush2.bf16.msra.mxu0 0
    %373 = vmatprep.subr.bf16.mxu0 0
    %374 = vmatpush2.bf16.msra.mxu0 0
    %375 = vmatprep.subr.bf16.mxu0 0
    %376 = vmatpush2.bf16.msra.mxu0 0
    %377 = vmatprep.mubr.bf16.mxu0 0
    %378 = vmatmul.mubr.bf16.gmra.mxu0 %v176
    %v379 = vpop.f32.mrf.mxu0
    %v380 = vadd.f32 %v90, %v379
    %v381 = vpop.f32.mrf.mxu0
    %v382 = vpop.f32.mrf.mxu0
    %v383 = vpop.f32.mrf.mxu0
    %384 = vdwg.mxu0
    %v385 = vmax.f32 %v276, 0.0
    %v386 = vpack.c.bf16 %v385, %v385
    %v387 = vmax.f32 %v380, 0.0
    %v388 = vpack.c.bf16 %v387, %v387
    %v389 = vld [vmem:[#allocation8] sm:$0xf]
    %v390 = vld [vmem:[#allocation8 + $0x4] sm:$0xf]
    %v391 = vld [vmem:[#allocation8 + $0x8] sm:$0xf]
    %v392 = vld [vmem:[#allocation8 + $0xc] sm:$0xf]
    %v393 = vld [vmem:[#allocation8 + $0x10] sm:$0xf]
    %v394 = vld [vmem:[#allocation8 + $0x14] sm:$0xf]
    %v395 = vld [vmem:[#allocation8 + $0x18] sm:$0xf]
    %v396 = vld [vmem:[#allocation8 + $0x1c] sm:$0xf]
    %v397 = vld [vmem:[#allocation8 + $0x20] sm:$0xf]
    %v398 = vld [vmem:[#allocation8 + $0x24] sm:$0xf]
    %v399 = vld [vmem:[#allocation8 + $0x28] sm:$0xf]
    %v400 = vld [vmem:[#allocation8 + $0x2c] sm:$0xf]
    %v401 = vld [vmem:[#allocation8 + $0x30] sm:$0xf]
    %v402 = vld [vmem:[#allocation8 + $0x34] sm:$0xf]
    %v403 = vld [vmem:[#allocation8 + $0x38] sm:$0xf]
    %v404 = vld [vmem:[#allocation8 + $0x3c] sm:$0xf]
    %v405 = vld [vmem:[#allocation8 + $0x40] sm:$0xf]
    %v406 = vld [vmem:[#allocation8 + $0x44] sm:$0xf]
    %v407 = vld [vmem:[#allocation8 + $0x48] sm:$0xf]
    %v408 = vld [vmem:[#allocation8 + $0x4c] sm:$0xf]
    %v409 = vld [vmem:[#allocation8 + $0x50] sm:$0xf]
    %v410 = vld [vmem:[#allocation8 + $0x54] sm:$0xf]
    %v411 = vld [vmem:[#allocation8 + $0x58] sm:$0xf]
    %v412 = vld [vmem:[#allocation8 + $0x5c] sm:$0xf]
    %v413 = vld [vmem:[#allocation8 + $0x60] sm:$0xf]
    %v414 = vld [vmem:[#allocation8 + $0x64] sm:$0xf]
    %v415 = vld [vmem:[#allocation8 + $0x68] sm:$0xf]
    %v416 = vld [vmem:[#allocation8 + $0x6c] sm:$0xf]
    %v417 = vld [vmem:[#allocation8 + $0x70] sm:$0xf]
    %v418 = vld [vmem:[#allocation8 + $0x74] sm:$0xf]
    %v419 = vld [vmem:[#allocation8 + $0x78] sm:$0xf]
    %v420 = vld [vmem:[#allocation8 + $0x7c] sm:$0xf]
    %v437 = vunpack.c.l.b16 %v405
    %v438 = vunpack.c.l.b16 %v406
    %v439 = vunpack.c.l.b16 %v407
    %v440 = vunpack.c.l.b16 %v408
    %v441 = vunpack.c.l.b16 %v409
    %v442 = vunpack.c.l.b16 %v410
    %v443 = vunpack.c.l.b16 %v411
    %v444 = vunpack.c.l.b16 %v412
    %v445 = vunpack.c.l.b16 %v413
    %v446 = vunpack.c.l.b16 %v414
    %v447 = vunpack.c.l.b16 %v415
    %v448 = vunpack.c.l.b16 %v416
    %v449 = vunpack.c.l.b16 %v417
    %v450 = vunpack.c.l.b16 %v418
    %v451 = vunpack.c.l.b16 %v419
    %v452 = vunpack.c.l.b16 %v420
    %v453 = vpack.c.b16 %v438, %v437
    %v454 = vpack.c.b16 %v440, %v439
    %v455 = vpack.c.b16 %v442, %v441
    %v456 = vpack.c.b16 %v444, %v443
    %v457 = vpack.c.b16 %v446, %v445
    %v458 = vpack.c.b16 %v448, %v447
    %v459 = vpack.c.b16 %v450, %v449
    %v460 = vpack.c.b16 %v452, %v451
    %469 = vmatprep.subr.bf16.mxu0 0
    %470 = vmatpush1.bf16.msra.mxu0 %v460
    %471 = vmatprep.subr.bf16.mxu0 0
    %472 = vmatpush1.bf16.msra.mxu0 %v459
    %473 = vmatprep.subr.bf16.mxu0 0
    %474 = vmatpush1.bf16.msra.mxu0 %v458
    %475 = vmatprep.subr.bf16.mxu0 0
    %476 = vmatpush1.bf16.msra.mxu0 %v457
    %477 = vmatprep.subr.bf16.mxu0 0
    %478 = vmatpush1.bf16.msra.mxu0 %v456
    %479 = vmatprep.subr.bf16.mxu0 0
    %480 = vmatpush1.bf16.msra.mxu0 %v455
    %481 = vmatprep.subr.bf16.mxu0 0
    %482 = vmatpush1.bf16.msra.mxu0 %v454
    %483 = vmatprep.subr.bf16.mxu0 0
    %484 = vmatpush1.bf16.msra.mxu0 %v453
    %485 = vmatprep.subr.bf16.mxu0 0
    %486 = vmatpush2.bf16.msra.mxu0 0
    %487 = vmatprep.subr.bf16.mxu0 0
    %488 = vmatpush2.bf16.msra.mxu0 0
    %489 = vmatprep.subr.bf16.mxu0 0
    %490 = vmatpush2.bf16.msra.mxu0 0
    %491 = vmatprep.subr.bf16.mxu0 0
    %492 = vmatpush2.bf16.msra.mxu0 0
    %493 = vmatprep.subr.bf16.mxu0 0
    %494 = vmatpush2.bf16.msra.mxu0 0
    %495 = vmatprep.subr.bf16.mxu0 0
    %496 = vmatpush2.bf16.msra.mxu0 0
    %497 = vmatprep.subr.bf16.mxu0 0
    %498 = vmatpush2.bf16.msra.mxu0 0
    %499 = vmatprep.subr.bf16.mxu0 0
    %500 = vmatpush2.bf16.msra.mxu0 0
    %501 = vmatprep.mubr.bf16.mxu0 0
    %502 = vmatmul.mubr.bf16.gmra.mxu0 %v388
    %v503 = vpop.f32.mrf.mxu0
    %v504 = vadd.f32 0.0, %v503
    %v505 = vpop.f32.mrf.mxu0
    %v506 = vpop.f32.mrf.mxu0
    %v507 = vpop.f32.mrf.mxu0
    %508 = vdwg.mxu0
    %v525 = vunpack.c.l.b16 %v389
    %v526 = vunpack.c.l.b16 %v390
    %v527 = vunpack.c.l.b16 %v391
    %v528 = vunpack.c.l.b16 %v392
    %v529 = vunpack.c.l.b16 %v393
    %v530 = vunpack.c.l.b16 %v394
    %v531 = vunpack.c.l.b16 %v395
    %v532 = vunpack.c.l.b16 %v396
    %v533 = vunpack.c.l.b16 %v397
    %v534 = vunpack.c.l.b16 %v398
    %v535 = vunpack.c.l.b16 %v399
    %v536 = vunpack.c.l.b16 %v400
    %v537 = vunpack.c.l.b16 %v401
    %v538 = vunpack.c.l.b16 %v402
    %v539 = vunpack.c.l.b16 %v403
    %v540 = vunpack.c.l.b16 %v404
    %v541 = vpack.c.b16 %v526, %v525
    %v542 = vpack.c.b16 %v528, %v527
    %v543 = vpack.c.b16 %v530, %v529
    %v544 = vpack.c.b16 %v532, %v531
    %v545 = vpack.c.b16 %v534, %v533
    %v546 = vpack.c.b16 %v536, %v535
    %v547 = vpack.c.b16 %v538, %v537
    %v548 = vpack.c.b16 %v540, %v539
    %557 = vmatprep.subr.bf16.mxu0 0
    %558 = vmatpush1.bf16.msra.mxu0 %v548
    %559 = vmatprep.subr.bf16.mxu0 0
    %560 = vmatpush1.bf16.msra.mxu0 %v547
    %561 = vmatprep.subr.bf16.mxu0 0
    %562 = vmatpush1.bf16.msra.mxu0 %v546
    %563 = vmatprep.subr.bf16.mxu0 0
    %564 = vmatpush1.bf16.msra.mxu0 %v545
    %565 = vmatprep.subr.bf16.mxu0 0
    %566 = vmatpush1.bf16.msra.mxu0 %v544
    %567 = vmatprep.subr.bf16.mxu0 0
    %568 = vmatpush1.bf16.msra.mxu0 %v543
    %569 = vmatprep.subr.bf16.mxu0 0
    %570 = vmatpush1.bf16.msra.mxu0 %v542
    %571 = vmatprep.subr.bf16.mxu0 0
    %572 = vmatpush1.bf16.msra.mxu0 %v541
    %573 = vmatprep.subr.bf16.mxu0 0
    %574 = vmatpush2.bf16.msra.mxu0 0
    %575 = vmatprep.subr.bf16.mxu0 0
    %576 = vmatpush2.bf16.msra.mxu0 0
    %577 = vmatprep.subr.bf16.mxu0 0
    %578 = vmatpush2.bf16.msra.mxu0 0
    %579 = vmatprep.subr.bf16.mxu0 0
    %580 = vmatpush2.bf16.msra.mxu0 0
    %581 = vmatprep.subr.bf16.mxu0 0
    %582 = vmatpush2.bf16.msra.mxu0 0
    %583 = vmatprep.subr.bf16.mxu0 0
    %584 = vmatpush2.bf16.msra.mxu0 0
    %585 = vmatprep.subr.bf16.mxu0 0
    %586 = vmatpush2.bf16.msra.mxu0 0
    %587 = vmatprep.subr.bf16.mxu0 0
    %588 = vmatpush2.bf16.msra.mxu0 0
    %589 = vmatprep.mubr.bf16.mxu0 0
    %590 = vmatmul.mubr.bf16.gmra.mxu0 %v386
    %v591 = vpop.f32.mrf.mxu0
    %v592 = vadd.f32 %v504, %v591
    %v593 = vpop.f32.mrf.mxu0
    %v594 = vpop.f32.mrf.mxu0
    %v595 = vpop.f32.mrf.mxu0
    %596 = vdwg.mxu0
    %v597 = vadd.f32 %v592, %v91
    %598 = vst [vmem:[#allocation11] sm:$0xff] %v597
    // Predicated region
    $region42: #{tpu_custom_call.1} parent=1 // pred_check
      _
    $region43: #{tpu_custom_call.1} parent=1 // pred_check_branch
      %600 = sbr.rel (0) target = $region45
    $region44: #{tpu_custom_call.1} parent=1 // pred_region
      %s602 = ssub.s32 128, 128
      %603 = vsyncadd [#allocation4], %s602
      %s605 = sshll.u32 [#allocation11], 4
      %s606 = int_to_ptr.vmem [resolvable:$true] %s605
      %608 = dma.vmem_to_hbm [thread:$0]  %s606, 128, %s5, [#allocation4]
    $region45: #{tpu_custom_call.1} parent=1 // pred_fallthru
      _
    // Predicated region
    $region46: #{tpu_custom_call.1} parent=1 // pred_check
      _
    $region47: #{tpu_custom_call.1} parent=1 // pred_check_branch
      %610 = sbr.rel (0) target = $region49
    $region48: #{tpu_custom_call.1} parent=1 // pred_region
      %611 = dma.done [#allocation4], 128
    $region49: #{tpu_custom_call.1} parent=1 // pred_fallthru
      _
    %612 = vsyncpa [#allocation3], 1
    %613 = vsyncpa [#allocation6], 1
    %614 = vsyncpa [#allocation9], 1
    %615 = vsyncpa [#allocation4], 1

</llo_original>
